<compile_context>
chip_gen: v5e
topology: v5e:2x2
jax: 0.10.0
libtpu: 0.0.40
codegen_flags: <defaults>
</compile_context>

<pallas_src>
import jax
import jax.numpy as jnp
from jax import lax
from jax.experimental import pallas as pl
from jax.experimental.pallas import tpu as pltpu

KSIZE = 3  # kernel_size=3, padding=1, stride=1


def conv_bn_relu_kernel(x_ref, w_ref, shift_ref, o_ref):
    # One (batch n, row-strip t) grid step.
    #   x_ref:     (H+2, C_in*W)         bf16 H-halo-padded row slab for batch n
    #                                         (lane index = ci*W + w)
    #   w_ref:     (3*C_in*W, C_out*W)   bf16 Toeplitz conv weights, kh-major K;
    #                                         W-padding and BN scale folded in.
    #   shift_ref: (1, C_out*W)          f32  folded conv-bias + BN shift
    #   o_ref:     (TH, C_out*W)         f32  lane-dense output strip
    #                                         (lane index = co*W + w)
    TH, _ = o_ref.shape
    h0 = pl.multiple_of(pl.program_id(1) * TH, TH)

    # Single aligned (TH+2)-row load; build the (TH, 3*C_in*W) im2col-over-H
    # LHS with three static in-register row shifts (kh-major lane concat).
    xs = x_ref[pl.ds(h0, TH + KSIZE - 1), :]
    lhs = jnp.concatenate([xs[kh:kh + TH, :] for kh in range(KSIZE)], axis=1)

    # One MXU matmul, K = 3*C_in*W, f32 accumulation.
    acc = jnp.dot(lhs, w_ref[...], preferred_element_type=jnp.float32)

    # Fused (conv bias + BatchNorm) shift epilogue, then ReLU; full-width store.
    o_ref[...] = jnp.maximum(acc + shift_ref[...], 0.0).astype(o_ref.dtype)


def _pick_strip_height(H):
    """Largest multiple of 8 that divides H, capped at 256 output rows."""
    if H % 8 != 0:
        return H  # fallback: single (misaligned) strip
    th = 8
    for cand in range(8, min(H, 256) + 1, 8):
        if H % cand == 0:
            th = cand
    return th


def conv_block_forward(x_nchw, w_hwio, conv_bias, gamma, beta,
                       running_mean, running_var, eps=1e-5):
    """x_nchw: (N, C_in, H, W) float32. Returns (N, C_out, H, W) float32."""
    N, C_in, H, W = x_nchw.shape
    C_out = w_hwio.shape[-1]
    TH = _pick_strip_height(H)

    # ---- BN folding: scale into the weights, shift into one vector ----
    inv_std = 1.0 / jnp.sqrt(running_var + eps)
    eff_scale = gamma * inv_std                                   # (C_out,)
    eff_shift = eff_scale * (conv_bias - running_mean) + beta     # (C_out,)
    w_eff = w_hwio * eff_scale                                    # (3,3,Ci,Co)

    # ---- Toeplitz expansion along W (folds the W-direction zero padding) ----
    # B[kh, ci*W + w_in, co*W + w_out] = w_eff[kh, w_in - w_out + 1, ci, co]
    kw = jnp.arange(W)[:, None] - jnp.arange(W)[None, :] + 1      # (W_in, W_out)
    valid = (kw >= 0) & (kw < KSIZE)
    tw = w_eff[:, jnp.clip(kw, 0, KSIZE - 1), :, :]               # (3,Wi,Wo,Ci,Co)
    tw = jnp.where(valid[None, :, :, None, None], tw, 0.0)
    tw = jnp.transpose(tw, (0, 3, 1, 4, 2))                       # (3,Ci,Wi,Co,Wo)
    # kh-major flattened K axis -> matches the in-kernel lane concat order.
    w_toep = tw.reshape(KSIZE * C_in * W, C_out * W).astype(jnp.bfloat16)

    shift_row = jnp.repeat(eff_shift, W).reshape(1, C_out * W).astype(jnp.float32)

    # ---- input layout: NCHW -> bf16 (N, H+2, C_in*W) row slab (one pass) ----
    x_rows = jnp.transpose(x_nchw, (0, 2, 1, 3)).reshape(N, H, C_in * W)
    x_rows = jnp.pad(x_rows.astype(jnp.bfloat16), ((0, 0), (1, 1), (0, 0)))

    out_rows = pl.pallas_call(
        conv_bn_relu_kernel,
        out_shape=jax.ShapeDtypeStruct((N, H, C_out * W), jnp.float32),
        grid_spec=pltpu.PrefetchScalarGridSpec(
            num_scalar_prefetch=0,
            grid=(N, H // TH),
            in_specs=[
                # Per-batch activation slab: index map ignores t, so it is
                # DMA'd once per batch element and stays resident across strips.
                pl.BlockSpec((None, H + 2, C_in * W), lambda n, t: (n, 0, 0)),
                pl.BlockSpec((KSIZE * C_in * W, C_out * W), lambda n, t: (0, 0)),
                pl.BlockSpec((1, C_out * W), lambda n, t: (0, 0)),
            ],
            out_specs=pl.BlockSpec((None, TH, C_out * W), lambda n, t: (n, t, 0)),
        ),
        compiler_params=pltpu.CompilerParams(
            dimension_semantics=("parallel", "parallel"),
            vmem_limit_bytes=32 * 1024 * 1024),
    )(x_rows, w_toep, shift_row)

    # ---- output layout: (N, H, C_out*W) -> NCHW (free reshape + transpose) ----
    return jnp.transpose(out_rows.reshape(N, H, C_out, W), (0, 2, 1, 3))


def reference_forward(x_nchw, w_hwio, conv_bias, gamma, beta,
                      running_mean, running_var, eps=1e-5):
    """Pure-JAX f32 reference (lax conv + eval-mode BN + ReLU)."""
    w_oihw = jnp.transpose(w_hwio, (3, 2, 0, 1))
    z = lax.conv_general_dilated(
        x_nchw, w_oihw, window_strides=(1, 1), padding=((1, 1), (1, 1)),
        dimension_numbers=("NCHW", "OIHW", "NCHW"))
    z = z + conv_bias.reshape(1, -1, 1, 1)
    z = (z - running_mean.reshape(1, -1, 1, 1)) / jnp.sqrt(
        running_var.reshape(1, -1, 1, 1) + eps)
    z = z * gamma.reshape(1, -1, 1, 1) + beta.reshape(1, -1, 1, 1)
    return jnp.maximum(z, 0.0)


if __name__ == "__main__":
    N, C_in, C_out, H, W = 2, 4, 8, 16, 16

    key = jax.random.PRNGKey(0)
    kx, kw, kb, kg, kbeta, km, kv = jax.random.split(key, 7)

    x = jax.random.normal(kx, (N, C_in, H, W), dtype=jnp.float32)
    # Conv2d(ch_in=4, ch_out=8, k=3) parameters (HWIO layout for the kernel).
    w_hwio = jax.random.normal(kw, (KSIZE, KSIZE, C_in, C_out),
                               dtype=jnp.float32) * 0.1
    conv_bias = jax.random.normal(kb, (C_out,), dtype=jnp.float32) * 0.1
    # BatchNorm2d(ch_out=8) parameters / running stats (deterministic).
    gamma = 1.0 + 0.1 * jax.random.normal(kg, (C_out,), dtype=jnp.float32)
    beta = 0.1 * jax.random.normal(kbeta, (C_out,), dtype=jnp.float32)
    running_mean = 0.1 * jax.random.normal(km, (C_out,), dtype=jnp.float32)
    running_var = jax.random.uniform(kv, (C_out,), dtype=jnp.float32,
                                     minval=0.5, maxval=1.5)

    out = conv_block_forward(x, w_hwio, conv_bias, gamma, beta,
                             running_mean, running_var)
    out = jax.block_until_ready(out)

    ref = reference_forward(x, w_hwio, conv_bias, gamma, beta,
                            running_mean, running_var)
    assert out.shape == (N, C_out, H, W)
    # bf16 MXU operands (f32 accumulation) vs a pure-f32 reference:
    # quantization of x/weights to bf16 bounds the error well under 3e-2 here.
    assert jnp.allclose(out, ref, atol=3e-2, rtol=3e-2), "mismatch vs reference"

    print("KERNEL_OK")
</pallas_src>

<mosaic_0001>
module attributes {stable_mosaic.version = 11 : i64} {
  func.func @conv_bn_relu_kernel(%arg0: i32, %arg1: i32, %arg2: memref<1x18x64xbf16, #tpu.memory_space<vmem>>, %arg3: memref<192x128xbf16, #tpu.memory_space<vmem>>, %arg4: memref<1x128xf32, #tpu.memory_space<vmem>>, %arg5: memref<1x16x128xf32, #tpu.memory_space<vmem>>) attributes {dimension_semantics = [#tpu.dimension_semantics<parallel>, #tpu.dimension_semantics<parallel>], iteration_bounds = array<i64: 2, 1>, scalar_prefetch = 0 : i64, scratch_operands = 0 : i64, tpu.core_type = #tpu.core_type<tc>, window_params = [{transform_indices = @transform_0, window_bounds = array<i64: 1, 18, 64>}, {pipeline_mode = #tpu.pipeline_mode<synchronous>, transform_indices = @transform_1, window_bounds = array<i64: 192, 128>}, {pipeline_mode = #tpu.pipeline_mode<synchronous>, transform_indices = @transform_2, window_bounds = array<i64: 1, 128>}, {transform_indices = @transform_3, window_bounds = array<i64: 1, 16, 128>}]} {
    %c16_i32 = arith.constant 16 : i32
    %0 = arith.muli %arg1, %c16_i32 : i32
    %1 = tpu.assume_multiple %0, 16 : i32
    %c0 = arith.constant 0 : index
    %2 = arith.index_cast %1 : i32 to index
    %c0_0 = arith.constant 0 : index
    %3 = vector.load %arg2[%c0, %2, %c0_0] : memref<1x18x64xbf16, #tpu.memory_space<vmem>>, vector<1x18x64xbf16>
    %4 = vector.shape_cast %3 : vector<1x18x64xbf16> to vector<18x64xbf16>
    %5 = vector.extract_strided_slice %4 {offsets = [0, 0], sizes = [16, 64], strides = [1, 1]} : vector<18x64xbf16> to vector<16x64xbf16>
    %6 = vector.extract_strided_slice %4 {offsets = [1, 0], sizes = [16, 64], strides = [1, 1]} : vector<18x64xbf16> to vector<16x64xbf16>
    %7 = vector.extract_strided_slice %4 {offsets = [2, 0], sizes = [16, 64], strides = [1, 1]} : vector<18x64xbf16> to vector<16x64xbf16>
    %8 = tpu.concatenate %5, %6, %7 in 1 : vector<16x64xbf16>, vector<16x64xbf16>, vector<16x64xbf16> -> vector<16x192xbf16>
    %c0_1 = arith.constant 0 : index
    %c0_2 = arith.constant 0 : index
    %9 = vector.load %arg3[%c0_1, %c0_2] : memref<192x128xbf16, #tpu.memory_space<vmem>>, vector<192x128xbf16>
    %cst = arith.constant dense<0.000000e+00> : vector<16x128xf32>
    %10 = tpu.matmul %8, %9, %cst {dimension_numbers = #tpu.dot_dimension_numbers<[1], [0], [0], [1], [0, 0, 1, 1], [], []>} : vector<16x192xbf16>, vector<192x128xbf16>, vector<16x128xf32> -> vector<16x128xf32>
    %c0_3 = arith.constant 0 : index
    %c0_4 = arith.constant 0 : index
    %11 = vector.load %arg4[%c0_3, %c0_4] : memref<1x128xf32, #tpu.memory_space<vmem>>, vector<1x128xf32>
    %12 = vector.broadcast %11 : vector<1x128xf32> to vector<16x128xf32>
    %13 = arith.addf %10, %12 : vector<16x128xf32>
    %cst_5 = arith.constant 0.000000e+00 : f32
    %14 = vector.broadcast %cst_5 : f32 to vector<16x128xf32>
    %15 = arith.maximumf %13, %14 : vector<16x128xf32>
    %c0_6 = arith.constant 0 : index
    %c0_7 = arith.constant 0 : index
    %c0_8 = arith.constant 0 : index
    %16 = vector.load %arg5[%c0_6, %c0_7, %c0_8] : memref<1x16x128xf32, #tpu.memory_space<vmem>>, vector<1x16x128xf32>
    %17 = vector.shape_cast %16 : vector<1x16x128xf32> to vector<16x128xf32>
    %18 = vector.shape_cast %15 : vector<16x128xf32> to vector<1x16x128xf32>
    tpu.vector_store %arg5[%c0_6, %c0_7, %c0_8], %18 {strides = array<i32>} : memref<1x16x128xf32, #tpu.memory_space<vmem>>, vector<1x16x128xf32>,
    return
  }
  func.func @transform_0(%arg0: i32, %arg1: i32) -> (i32, i32, i32) {
    %c0_i32 = arith.constant 0 : i32
    %c0_i32_0 = arith.constant 0 : i32
    %c0_i32_1 = arith.constant 0 : i32
    return %arg0, %c0_i32, %c0_i32_0 : i32, i32, i32
  }
  func.func @transform_1(%arg0: i32, %arg1: i32) -> (i32, i32) {
    %c0_i32 = arith.constant 0 : i32
    %c0_i32_0 = arith.constant 0 : i32
    %c0_i32_1 = arith.constant 0 : i32
    return %c0_i32, %c0_i32_0 : i32, i32
  }
  func.func @transform_2(%arg0: i32, %arg1: i32) -> (i32, i32) {
    %c0_i32 = arith.constant 0 : i32
    %c0_i32_0 = arith.constant 0 : i32
    %c0_i32_1 = arith.constant 0 : i32
    return %c0_i32, %c0_i32_0 : i32, i32
  }
  func.func @transform_3(%arg0: i32, %arg1: i32) -> (i32, i32, i32) {
    %c0_i32 = arith.constant 0 : i32
    %c0_i32_0 = arith.constant 0 : i32
    return %arg0, %arg1, %c0_i32 : i32, i32, i32
  }
}

</mosaic_0001>

<llo_original>
// kernel: tpu_custom_call.1
$region0: #{tpu_custom_call.1}
  #allocation0 [shape = 'u32[]', space=smem, size = 0x4, offset = 0x4, fixed_abs, tag = 'smem constant byte address 0x4 - core index']
  #allocation1 [shape = 'u32[72,128]{1,0:T(1,128)}', space=vmem, size = 0x9000, scoped, tag = 'internal scratch']
  %s0 = inlined_call_operand.vmem [shape: bf16[2,18,64], index: 0, kind: input, shape index: {}]
  %s1 = inlined_call_operand.hbm [shape: bf16[192,128], index: 1, kind: input, shape index: {}]
  %s2 = inlined_call_operand.vmem [shape: f32[1,128], index: 2, kind: input, shape index: {}]
  %s3 = inlined_call_operand.hbm [shape: f32[2,16,128], index: 3, kind: output, shape index: {}]
  %s4 = sld [smem:[#allocation0]]
  $region49: #{tpu_custom_call.1} parent=0
    _
  %s6 = ssub.s32 1, %s4
  %s7 = scalar_select 0, %s6, %s4
  $region1: #{tpu_custom_call.1} parent=0
    #allocation2 [shape = 'u8[49152]{0}', space=vmem, size = 0xc000, scoped, tag = 'input window, operand 1, single buffered']
    #allocation3 [shape = 's32[2]{0}', space=sflag, size = 0x8, scoped, tag = 'scoped memory for tpu_custom_call.1']
    #allocation4 [shape = 's32[2]{0}', space=sflag, size = 0x8, scoped, tag = 'scoped memory for tpu_custom_call.1']
    #allocation5 [shape = 'u8[16384]{0}', space=vmem, size = 0x4000, scoped, tag = 'output window, operand 0']
    %8 = vsyncpa [#allocation3], 0
    %9 = vsyncpa [#allocation4], 0
    %s10 = scalar_lea.sflag [#allocation4], 1
    %11 = vsyncpa %s10, 0
    loop: start=0, step=1, limit=4
    $region2: #{tpu_custom_call.1} parent=1 // loop_pre_header
      _
    $region3: #{tpu_custom_call.1} parent=1 // loop_header
      %s13 = sphi 0, %s17
      %p14 = scmp.ge.s32.totalorder %s13, 4
      %s20 = sphi 0, %s32
      %s21 = sphi 0, %s28
      %s22 = sphi 0, %s20
      %s23 = sphi 0, %s21
      %s24 = sphi 0, %s22
      %s25 = sphi 0, %s23
      %s35 = sphi 0, %s37
      %s38 = sphi 0, %s35
      %s39 = sphi 0, %s38
      %s55 = sphi 0, %s39
      %s59 = sphi 0, %s59
      %s61 = sphi 0, %s59
      %s62 = sphi 0, %s61
      %s76 = sphi 0, %s62
      %s80 = sphi 0, %s80
      %s82 = sphi 0, %s80
      %s83 = sphi 0, %s82
      %s97 = sphi 0, %s83
      %s105 = sphi 0, %s107
      %s108 = sphi 0, %s105
      %s109 = sphi 0, %s108
      %s125 = sphi 0, %s109
    $region4: #{tpu_custom_call.1} parent=1 // loop_header_branch
      %16 = sbr.rel (%p14) target = $region8
    $region5: #{tpu_custom_call.1} parent=1 // loop_body
      %s18 = ssub.s32 %s13, 1
      %s19 = ssub.s32 %s13, 2
      %s26 = sadd.s32 1, %s21
      %p27 = scmp.ge.s32.totalorder %s26, 1
      %s28 = scalar_select %p27, 0, %s26
      %s29 = sadd.s32 1, %s20
      %s30 = scalar_select %p27, %s29, %s20
      %p31 = scmp.ge.s32.totalorder %s30, 2
      %s32 = scalar_select %p31, 0, %s30
      %s33 = ssub.s32 %s20, %s32
      %p34 = scmp.eq.s32.totalorder %s33, 0
      %s36 = sadd.s32 %s35, 1
      %s37 = scalar_select %p34, %s35, %s36
      %p40 = pneg %p34
      %p41 = scmp.eq.s32.totalorder %s13, 1
      %p42 = por %p40, %p41
      %p43 = scmp.ne.s32.totalorder %s35, %s38
      %p44 = scmp.eq.s32.totalorder %s13, 0
      %p45 = por %p43, %p44
      %p46 = scmp.ne.s32.totalorder %s35, %s38
      %p47 = scmp.eq.s32.totalorder %s18, 1
      %p48 = por %p46, %p47
      %p49 = scmp.ne.s32.totalorder %s38, %s39
      %p50 = scmp.eq.s32.totalorder %s18, 0
      %p51 = por %p49, %p50
      %p52 = scmp.ne.s32.totalorder %s38, %s39
      %p53 = scmp.eq.s32.totalorder %s19, 1
      %p54 = por %p52, %p53
      %p56 = scmp.ne.s32.totalorder %s39, %s55
      %p57 = scmp.eq.s32.totalorder %s19, 0
      %p58 = por %p56, %p57
      %s60 = sadd.s32 %s59, 1
      %p63 = scmp.eq.s32.totalorder %s13, 1
      %p64 = scmp.ne.s32.totalorder %s59, %s61
      %p65 = scmp.eq.s32.totalorder %s13, 0
      %p66 = por %p64, %p65
      %p67 = scmp.ne.s32.totalorder %s59, %s61
      %p68 = scmp.eq.s32.totalorder %s18, 1
      %p69 = por %p67, %p68
      %p70 = scmp.ne.s32.totalorder %s61, %s62
      %p71 = scmp.eq.s32.totalorder %s18, 0
      %p72 = por %p70, %p71
      %p73 = scmp.ne.s32.totalorder %s61, %s62
      %p74 = scmp.eq.s32.totalorder %s19, 1
      %p75 = por %p73, %p74
      %p77 = scmp.ne.s32.totalorder %s62, %s76
      %p78 = scmp.eq.s32.totalorder %s19, 0
      %p79 = por %p77, %p78
      %s81 = sadd.s32 %s80, 1
      %p84 = scmp.eq.s32.totalorder %s13, 1
      %p85 = scmp.ne.s32.totalorder %s80, %s82
      %p86 = scmp.eq.s32.totalorder %s13, 0
      %p87 = por %p85, %p86
      %p88 = scmp.ne.s32.totalorder %s80, %s82
      %p89 = scmp.eq.s32.totalorder %s18, 1
      %p90 = por %p88, %p89
      %p91 = scmp.ne.s32.totalorder %s82, %s83
      %p92 = scmp.eq.s32.totalorder %s18, 0
      %p93 = por %p91, %p92
      %p94 = scmp.ne.s32.totalorder %s82, %s83
      %p95 = scmp.eq.s32.totalorder %s19, 1
      %p96 = por %p94, %p95
      %p98 = scmp.ne.s32.totalorder %s83, %s97
      %p99 = scmp.eq.s32.totalorder %s19, 0
      %p100 = por %p98, %p99
      %s101 = ssub.s32 %s20, %s32
      %s102 = ssub.s32 %s21, %s28
      %s103 = sor.u32 %s101, %s102
      %p104 = scmp.eq.s32.totalorder %s103, 0
      %s106 = sadd.s32 %s105, 1
      %s107 = scalar_select %p104, %s105, %s106
      %p110 = pneg %p104
      %p111 = scmp.eq.s32.totalorder %s13, 1
      %p112 = por %p110, %p111
      %p113 = scmp.ne.s32.totalorder %s105, %s108
      %p114 = scmp.eq.s32.totalorder %s13, 0
      %p115 = por %p113, %p114
      %p116 = scmp.ne.s32.totalorder %s105, %s108
      %p117 = scmp.eq.s32.totalorder %s18, 1
      %p118 = por %p116, %p117
      %p119 = scmp.ne.s32.totalorder %s108, %s109
      %p120 = scmp.eq.s32.totalorder %s18, 0
      %p121 = por %p119, %p120
      %p122 = scmp.ne.s32.totalorder %s108, %s109
      %p123 = scmp.eq.s32.totalorder %s19, 1
      %p124 = por %p122, %p123
      %p126 = scmp.ne.s32.totalorder %s109, %s125
      %p127 = scmp.eq.s32.totalorder %s19, 0
      %p128 = por %p126, %p127
      %p129 = scmp.le.s32.totalorder 1, %s13
      %p130 = scmp.lt.s32.totalorder %s13, 3
      %p131 = pnand %p129, %p130
      %p132 = pneg %p131
      // Predicated region
      $region9: #{tpu_custom_call.1} parent=5 // pred_check
        _
      $region10: #{tpu_custom_call.1} parent=5 // pred_check_branch
        %134 = sbr.rel (%p131) target = $region12
      $region11: #{tpu_custom_call.1} parent=5 // pred_region
        %s135 = ssub.s32 %s13, 1
        // Predicated region
        $region13: #{tpu_custom_call.1} parent=11 // pred_check
          %p136 = pneg %p72
        $region14: #{tpu_custom_call.1} parent=11 // pred_check_branch
          %138 = sbr.rel (%p136) target = $region16
        $region15: #{tpu_custom_call.1} parent=11 // pred_region
          %140 = vsyncadd [#allocation3], 0
          %s141 = sshll.u32 %s1, 4
          %s142 = int_to_ptr.hbm [resolvable:$true] %s141
          %s143 = sshll.u32 [#allocation2], 4
          %s144 = int_to_ptr.vmem [resolvable:$true] %s143
          %149 = dma.hbm_to_vmem [thread:$0]  %s142, 1536, %s144, [#allocation3], 64, 64, 4
        $region16: #{tpu_custom_call.1} parent=11 // pred_fallthru
          _
        // Predicated region
        $region17: #{tpu_custom_call.1} parent=11 // pred_check
          %p150 = pneg %p93
        $region18: #{tpu_custom_call.1} parent=11 // pred_check_branch
          %152 = sbr.rel (%p150) target = $region20
        $region19: #{tpu_custom_call.1} parent=11 // pred_region
          _
        $region20: #{tpu_custom_call.1} parent=11 // pred_fallthru
          _
      $region12: #{tpu_custom_call.1} parent=5 // pred_fallthru
        _
      %p153 = scmp.lt.s32.totalorder %s13, 2
      // Predicated region
      $region21: #{tpu_custom_call.1} parent=5 // pred_check
        %p154 = pneg %p153
      $region22: #{tpu_custom_call.1} parent=5 // pred_check_branch
        %156 = sbr.rel (%p154) target = $region24
      $region23: #{tpu_custom_call.1} parent=5 // pred_region
        // Predicated region
        $region25: #{tpu_custom_call.1} parent=23 // pred_check
          %p157 = pneg %p45
        $region26: #{tpu_custom_call.1} parent=23 // pred_check_branch
          %159 = sbr.rel (%p157) target = $region28
        $region27: #{tpu_custom_call.1} parent=23 // pred_region
          %p160 = scmp.lt.s32.totalorder %s20, 1
          %s161 = scalar_select %p160, %s20, 1
          %s162 = smul.addr %s161, 3
          %s163 = smul.addr %s162, 4
          %s164 = scalar_lea.vmem %s0, %s163
        $region28: #{tpu_custom_call.1} parent=23 // pred_fallthru
          _
      $region24: #{tpu_custom_call.1} parent=5 // pred_fallthru
        _
      %p165 = scmp.le.s32.totalorder 1, %s13
      %p166 = scmp.lt.s32.totalorder %s13, 3
      %p167 = pnand %p165, %p166
      %p168 = pneg %p167
      // Predicated region
      $region29: #{tpu_custom_call.1} parent=5 // pred_check
        _
      $region30: #{tpu_custom_call.1} parent=5 // pred_check_branch
        %170 = sbr.rel (%p167) target = $region32
      $region31: #{tpu_custom_call.1} parent=5 // pred_region
        %s171 = ssub.s32 %s13, 1
        // Predicated region
        $region33: #{tpu_custom_call.1} parent=31 // pred_check
          %p172 = pneg %p72
        $region34: #{tpu_custom_call.1} parent=31 // pred_check_branch
          %174 = sbr.rel (%p172) target = $region36
        $region35: #{tpu_custom_call.1} parent=31 // pred_region
          %176 = dma.done [#allocation3], 1536
        $region36: #{tpu_custom_call.1} parent=31 // pred_fallthru
          _
        %p177 = scmp.lt.s32.totalorder %s22, 1
        %s178 = scalar_select %p177, %s22, 1
        %s179 = smul.addr %s178, 3
        %s180 = smul.addr %s179, 4
        %s181 = scalar_lea.vmem %s0, %s180
        %p182 = pneg %p51
        %p183 = pneg %p48
        %p184 = pneg %p72
        %p185 = pneg %p69
        %p186 = pneg %p93
        %p187 = pneg %p90
        %p188 = pneg %p121
        %p189 = pneg %p118
        %s190 = sand.u32 %s108, 1
        %s191 = scalar_lea.sflag [#allocation4], %s190
        %s192 = sand.u32 %s108, 1
        %s193 = smul.addr %s192, 16
        %s194 = scalar_lea.vmem [#allocation5], %s193
        %p195 = scmp.lt.s32.totalorder %s22, 1
        %s196 = scalar_select %p195, %s22, 1
        %s197 = smul.addr %s196, 3
        %s198 = smul.addr %s197, 4
        %s199 = scalar_lea.vmem %s0, %s198
        %s200 = smul.u32 2, %s23
        %s202 = smul.u32 %s23, 16
        %s203 = sshra.s32 %s202, 3
        %s204 = sand.u32 %s202, 7
        %s205 = smul.addr %s203, 4
        %s206 = scalar_lea.vmem %s199, %s205
        %v207 = vld [vmem:[%s206] sm:$0xf]
        %v208 = vld [vmem:[%s206 + $0x4] sm:$0xf]
        %v209 = vld [vmem:[%s206 + $0x8] sm:$0x1]
        %v212 = vunpack.c.l.b16 %v207
        %v213 = vunpack.c.l.b16 %v208
        %v214 = vpack.c.b16 %v213, %v212
        %v216 = vunpack.c.l.b16 %v209
        %v217 = vpack.c.b16 %v216, %v216
        %vm218 = vsmask.f32 7424
        %v220 = vshrl.u32 %v214, 16
        %v222 = vshll.u32 %v214, 16
        %v224 = vrot.slane %v222, 1
        %v225 = vor.u32 %v220, %v224
        %v227 = vshll.u32 %v217, 16
        %v229 = vrot.slane %v227, 1
        %v230 = vsel %vm218, %v225, %v229
        %231 = vrot.lane.b32.xlu0 %v230, 64
        %v232 = vpop.permute.xlu0 %231
        %vm233 = vcmask 1046528
        %v234 = vrot.slane %v214, 1
        %v235 = vrot.slane %v217, 1
        %v236 = vsel %vm233, %v234, %v235
        %vm237 = vcmask 523264
        %v239 = vsel %vm237, %v214, %v232
        %v241 = vld [vmem:[#allocation2] sm:$0xf]
        %v242 = vld [vmem:[#allocation2 + $0x4] sm:$0xf]
        %v243 = vld [vmem:[#allocation2 + $0x8] sm:$0xf]
        %v244 = vld [vmem:[#allocation2 + $0xc] sm:$0xf]
        %v245 = vld [vmem:[#allocation2 + $0x10] sm:$0xf]
        %v246 = vld [vmem:[#allocation2 + $0x14] sm:$0xf]
        %v247 = vld [vmem:[#allocation2 + $0x18] sm:$0xf]
        %v248 = vld [vmem:[#allocation2 + $0x1c] sm:$0xf]
        %v249 = vld [vmem:[#allocation2 + $0x20] sm:$0xf]
        %v250 = vld [vmem:[#allocation2 + $0x24] sm:$0xf]
        %v251 = vld [vmem:[#allocation2 + $0x28] sm:$0xf]
        %v252 = vld [vmem:[#allocation2 + $0x2c] sm:$0xf]
        %v253 = vld [vmem:[#allocation2 + $0x30] sm:$0xf]
        %v254 = vld [vmem:[#allocation2 + $0x34] sm:$0xf]
        %v255 = vld [vmem:[#allocation2 + $0x38] sm:$0xf]
        %v256 = vld [vmem:[#allocation2 + $0x3c] sm:$0xf]
        %v257 = vld [vmem:[#allocation2 + $0x40] sm:$0xf]
        %v258 = vld [vmem:[#allocation2 + $0x44] sm:$0xf]
        %v259 = vld [vmem:[#allocation2 + $0x48] sm:$0xf]
        %v260 = vld [vmem:[#allocation2 + $0x4c] sm:$0xf]
        %v261 = vld [vmem:[#allocation2 + $0x50] sm:$0xf]
        %v262 = vld [vmem:[#allocation2 + $0x54] sm:$0xf]
        %v263 = vld [vmem:[#allocation2 + $0x58] sm:$0xf]
        %v264 = vld [vmem:[#allocation2 + $0x5c] sm:$0xf]
        %v265 = vld [vmem:[%s2] sm:$0x1]
        %v267 = vperm.slane %v265, 0
        %v293 = vunpack.c.l.b16 %v241
        %v294 = vunpack.c.l.b16 %v242
        %v295 = vunpack.c.l.b16 %v243
        %v296 = vunpack.c.l.b16 %v244
        %v297 = vunpack.c.l.b16 %v245
        %v298 = vunpack.c.l.b16 %v246
        %v299 = vunpack.c.l.b16 %v247
        %v300 = vunpack.c.l.b16 %v248
        %v301 = vunpack.c.l.b16 %v249
        %v302 = vunpack.c.l.b16 %v250
        %v303 = vunpack.c.l.b16 %v251
        %v304 = vunpack.c.l.b16 %v252
        %v305 = vunpack.c.l.b16 %v253
        %v306 = vunpack.c.l.b16 %v254
        %v307 = vunpack.c.l.b16 %v255
        %v308 = vunpack.c.l.b16 %v256
        %v309 = vunpack.c.l.b16 %v257
        %v310 = vunpack.c.l.b16 %v258
        %v311 = vunpack.c.l.b16 %v259
        %v312 = vunpack.c.l.b16 %v260
        %v313 = vunpack.c.l.b16 %v261
        %v314 = vunpack.c.l.b16 %v262
        %v315 = vunpack.c.l.b16 %v263
        %v316 = vunpack.c.l.b16 %v264
        %v317 = vpack.c.b16 %v294, %v293
        %v318 = vpack.c.b16 %v296, %v295
        %v319 = vpack.c.b16 %v298, %v297
        %v320 = vpack.c.b16 %v300, %v299
        %v321 = vpack.c.b16 %v302, %v301
        %v322 = vpack.c.b16 %v304, %v303
        %v323 = vpack.c.b16 %v306, %v305
        %v324 = vpack.c.b16 %v308, %v307
        %v325 = vpack.c.b16 %v310, %v309
        %v326 = vpack.c.b16 %v312, %v311
        %v327 = vpack.c.b16 %v314, %v313
        %v328 = vpack.c.b16 %v316, %v315
        %v342 = vsel %vm237, %v236, 0
        %344 = vmatpush.bf16.msra.mxu0 %v324
        %345 = vmatpush.bf16.msra.mxu0 %v323
        %346 = vmatpush.bf16.msra.mxu0 %v322
        %347 = vmatpush.bf16.msra.mxu0 %v321
        %348 = vmatpush.bf16.msra.mxu0 %v320
        %349 = vmatpush.bf16.msra.mxu0 %v319
        %350 = vmatpush.bf16.msra.mxu0 %v318
        %351 = vmatpush.bf16.msra.mxu0 %v317
        %352 = vmatmul.bf16.gmra.mxu0 %v239
        %v353 = vpop.f32.mrf.mxu0
        %v354 = vadd.f32 %v267, %v353
        %v355 = vpop.f32.mrf.mxu0
        %v356 = vadd.f32 %v267, %v355
        %357 = vdwg.mxu0
        %358 = vmatpush.bf16.msra.mxu0 0
        %359 = vmatpush.bf16.msra.mxu0 0
        %360 = vmatpush.bf16.msra.mxu0 0
        %361 = vmatpush.bf16.msra.mxu0 0
        %362 = vmatpush.bf16.msra.mxu0 %v328
        %363 = vmatpush.bf16.msra.mxu0 %v327
        %364 = vmatpush.bf16.msra.mxu0 %v326
        %365 = vmatpush.bf16.msra.mxu0 %v325
        %366 = vmatmul.bf16.gmra.mxu0 %v342
        %v367 = vpop.f32.mrf.mxu0
        %v368 = vadd.f32 %v354, %v367
        %v369 = vpop.f32.mrf.mxu0
        %v370 = vadd.f32 %v356, %v369
        %371 = vdwg.mxu0
        %v372 = vmax.f32 %v368, 0.0
        %v373 = vmax.f32 %v370, 0.0
        %374 = vst [vmem:[%s194] sm:$0xff] %v372
        %375 = vst [vmem:[%s194 + $0x8] sm:$0xff] %v373
        %s376 = sand.u32 %s108, 1
        %s377 = scalar_lea.sflag [#allocation4], %s376
        %s378 = sand.u32 %s108, 1
        %s379 = smul.addr %s378, 16
        %s380 = scalar_lea.vmem [#allocation5], %s379
        // Predicated region
        $region37: #{tpu_custom_call.1} parent=31 // pred_check
          %p381 = pneg %p118
        $region38: #{tpu_custom_call.1} parent=31 // pred_check_branch
          %383 = sbr.rel (%p381) target = $region40
        $region39: #{tpu_custom_call.1} parent=31 // pred_region
          %s384 = smul.u32 2, %s23
          %386 = vsyncadd %s377, 0
          %s387 = smul.addr %s22, 2
          %s388 = sadd.s32 %s384, %s387
          %s389 = smul.addr %s388, 8
          %s390 = scalar_lea.hbm %s3, %s389
          %s391 = sshll.u32 %s380, 4
          %s392 = int_to_ptr.vmem [resolvable:$true] %s391
          %s393 = sshll.u32 %s390, 4
          %s394 = int_to_ptr.hbm [resolvable:$true] %s393
          %399 = dma.vmem_to_hbm [thread:$0]  %s392, 256, %s394, %s377, 128, 128, 8
        $region40: #{tpu_custom_call.1} parent=31 // pred_fallthru
          _
      $region32: #{tpu_custom_call.1} parent=5 // pred_fallthru
        _
      %p400 = scmp.le.s32.totalorder 2, %s13
      // Predicated region
      $region41: #{tpu_custom_call.1} parent=5 // pred_check
        %p401 = pneg %p400
      $region42: #{tpu_custom_call.1} parent=5 // pred_check_branch
        %403 = sbr.rel (%p401) target = $region44
      $region43: #{tpu_custom_call.1} parent=5 // pred_region
        %s404 = ssub.s32 %s13, 2
        // Predicated region
        $region45: #{tpu_custom_call.1} parent=43 // pred_check
          %p405 = pneg %p124
        $region46: #{tpu_custom_call.1} parent=43 // pred_check_branch
          %407 = sbr.rel (%p405) target = $region48
        $region47: #{tpu_custom_call.1} parent=43 // pred_region
          %s408 = sand.u32 %s109, 1
          %s409 = scalar_lea.sflag [#allocation4], %s408
          %s410 = sand.u32 %s109, 1
          %s411 = smul.addr %s410, 16
          %s412 = scalar_lea.vmem [#allocation5], %s411
          %414 = dma.done %s409, 256
        $region48: #{tpu_custom_call.1} parent=43 // pred_fallthru
          _
      $region44: #{tpu_custom_call.1} parent=5 // pred_fallthru
        _
    $region6: #{tpu_custom_call.1} parent=1 // loop_footer
      %s17 = sadd.s32 1, %s13
    $region7: #{tpu_custom_call.1} parent=1 // loop_footer_branch
      %12 = sbr.rel target = $region3
    $region8: #{tpu_custom_call.1} parent=1 // loop_exit
      _
    %415 = vsyncpa [#allocation3], 1
    %s416 = scalar_lea.sflag [#allocation3], 1
    %417 = vsyncpa %s416, 1
    %418 = vsyncpa [#allocation4], 1
    %s419 = scalar_lea.sflag [#allocation4], 1
    %420 = vsyncpa %s419, 1

</llo_original>
